<compile_context>
chip_gen: v7x
topology: tpu7x:2x2x1
jax: 0.10.0
libtpu: 0.0.40
codegen_flags: <defaults>
</compile_context>

<pallas_src>
import numpy as np
import jax
import jax.numpy as jnp
from jax import lax
from jax.experimental import pallas as pl
from jax.experimental.pallas import tpu as pltpu

# --- hyperparameters implied by the module ---------------------------------
STATE_DIM = 32
ACTION_DIM = 4
HIDDEN = 64
LANES = 2 * HIDDEN              # 128 : fused actor|critic lane width
LOGPROB_LANE = ACTION_DIM       # lane 4 of the output slab
VALUE_LANE = ACTION_DIM + 1     # lane 5 of the output slab
ACTION_STD = 0.5                # action_var = action_std ** 2
BATCH = 512                     # rollout-buffer sized batch
TILE_B = 128                    # rows per grid step
USE_ORTH = True                 # "trick3": orthogonal init, gain sqrt(2)


# ----------------------------- kernel --------------------------------------
def actor_critic_kernel(
    state_ref, action_ref, invvar_ref, c0_ref,
    w1_ref, b1_ref, w2_ref, b2_ref, w3_ref, b3_ref,
    out_ref,
):
    # fused layer 1:  [TB,32] @ [32,128]  (actor hidden | critic hidden)
    x = state_ref[...].astype(jnp.bfloat16)
    h1 = jnp.tanh(
        jnp.dot(x, w1_ref[...], preferred_element_type=jnp.float32)
        + b1_ref[...])

    # fused layer 2:  [TB,128] @ blockdiag(aw2,cw2) [128,128]
    h2 = jnp.tanh(
        jnp.dot(h1.astype(jnp.bfloat16), w2_ref[...],
                preferred_element_type=jnp.float32)
        + b2_ref[...])

    # fused heads:    [TB,128] @ [128,128]
    #   cols 0:4  -> actor pre-tanh mean, col 5 -> critic value, rest zero
    o3 = (jnp.dot(h2.astype(jnp.bfloat16), w3_ref[...],
                  preferred_element_type=jnp.float32)
          + b3_ref[...])

    lane = lax.broadcasted_iota(jnp.int32, o3.shape, 1)
    # tanh only takes effect on the mean lanes; value / padding lanes pass through
    slab = jnp.where(lane < ACTION_DIM, jnp.tanh(o3), o3)

    # diagonal-Gaussian log_prob: action padded to 128 lanes, inv_var padded
    # with zeros so only the first ACTION_DIM lanes contribute to the quad.
    diff = action_ref[...] - slab
    quad = jnp.sum(diff * diff * invvar_ref[...], axis=-1, keepdims=True)
    logprob = -0.5 * (quad + c0_ref[0, 0])               # c0 = k*log2pi+logdet

    out_ref[...] = jnp.where(lane == LOGPROB_LANE,
                             jnp.broadcast_to(logprob, slab.shape), slab)


# ----------------------------- wrapper --------------------------------------
def actor_critic_evaluate(state, action, action_var, fused):
    """Returns (action_mean, action_logprobs, state_values, dist_entropy)."""
    B = state.shape[0]
    assert B % TILE_B == 0, "batch must be a multiple of TILE_B"

    inv_var = 1.0 / action_var                                     # [1, A]
    inv_var_pad = jnp.zeros((1, LANES), jnp.float32)
    inv_var_pad = inv_var_pad.at[:, :ACTION_DIM].set(inv_var)
    action_pad = jnp.zeros((B, LANES), jnp.float32)
    action_pad = action_pad.at[:, :ACTION_DIM].set(action)

    logdet = jnp.sum(jnp.log(action_var))
    log_two_pi = jnp.log(jnp.float32(2.0 * np.pi))
    c0 = (ACTION_DIM * log_two_pi + logdet).reshape(1, 1).astype(jnp.float32)

    grid = (B // TILE_B,)
    const = lambda i: (0, 0)      # weights stay resident across grid steps
    slab = pl.pallas_call(
        actor_critic_kernel,
        out_shape=jax.ShapeDtypeStruct((B, LANES), jnp.float32),
        grid=grid,
        in_specs=[
            pl.BlockSpec((TILE_B, STATE_DIM), lambda i: (i, 0)),   # state
            pl.BlockSpec((TILE_B, LANES), lambda i: (i, 0)),       # action_pad
            pl.BlockSpec((1, LANES), const),                       # inv_var
            pl.BlockSpec(memory_space=pltpu.MemorySpace.SMEM),     # c0 scalar
            pl.BlockSpec((STATE_DIM, LANES), const),               # w1
            pl.BlockSpec((1, LANES), const),                       # b1
            pl.BlockSpec((LANES, LANES), const),                   # w2
            pl.BlockSpec((1, LANES), const),                       # b2
            pl.BlockSpec((LANES, LANES), const),                   # w3
            pl.BlockSpec((1, LANES), const),                       # b3
        ],
        out_specs=pl.BlockSpec((TILE_B, LANES), lambda i: (i, 0)),
        compiler_params=pltpu.CompilerParams(
            dimension_semantics=("parallel",)),
    )(state, action_pad, inv_var_pad, c0,
      fused["w1"], fused["b1"], fused["w2"], fused["b2"],
      fused["w3"], fused["b3"])

    mean = slab[:, :ACTION_DIM]
    logprob = slab[:, LOGPROB_LANE:LOGPROB_LANE + 1]
    value = slab[:, VALUE_LANE:VALUE_LANE + 1]

    # entropy of N(mean, diag(var)) is constant wrt. state -> computed on host
    entropy = 0.5 * (ACTION_DIM * (1.0 + log_two_pi) + logdet)
    entropy = jnp.full((B, 1), entropy, jnp.float32)
    return mean, logprob, value, entropy


# ----------------------- parameter init & fusion ----------------------------
def _init_linear(key, fan_in, fan_out):
    if USE_ORTH:
        gain = float(np.sqrt(2.0))
        w = jax.nn.initializers.orthogonal(scale=gain)(
            key, (fan_in, fan_out), jnp.float32)
        b = jnp.zeros((1, fan_out), jnp.float32)
    else:
        bound = 1.0 / np.sqrt(fan_in)
        kw, kb = jax.random.split(key)
        w = jax.random.uniform(kw, (fan_in, fan_out), jnp.float32, -bound, bound)
        b = jax.random.uniform(kb, (1, fan_out), jnp.float32, -bound, bound)
    return w, b


def make_params(key):
    keys = jax.random.split(key, 6)
    aw1, ab1 = _init_linear(keys[0], STATE_DIM, HIDDEN)
    aw2, ab2 = _init_linear(keys[1], HIDDEN, HIDDEN)
    aw3, ab3 = _init_linear(keys[2], HIDDEN, ACTION_DIM)
    cw1, cb1 = _init_linear(keys[3], STATE_DIM, HIDDEN)
    cw2, cb2 = _init_linear(keys[4], HIDDEN, HIDDEN)
    cw3, cb3 = _init_linear(keys[5], HIDDEN, 1)
    return dict(aw1=aw1, ab1=ab1, aw2=aw2, ab2=ab2, aw3=aw3, ab3=ab3,
                cw1=cw1, cb1=cb1, cw2=cw2, cb2=cb2, cw3=cw3, cb3=cb3)


def fuse_params(p):
    """Pack actor/critic layers into 128-lane-wide bf16 weight slabs."""
    w1 = jnp.concatenate([p["aw1"], p["cw1"]], axis=1)             # [32,128]
    b1 = jnp.concatenate([p["ab1"], p["cb1"]], axis=1)             # [1,128]
    w2 = jnp.zeros((LANES, LANES), jnp.float32)
    w2 = w2.at[:HIDDEN, :HIDDEN].set(p["aw2"])
    w2 = w2.at[HIDDEN:, HIDDEN:].set(p["cw2"])                     # block-diag
    b2 = jnp.concatenate([p["ab2"], p["cb2"]], axis=1)
    w3 = jnp.zeros((LANES, LANES), jnp.float32)
    w3 = w3.at[:HIDDEN, :ACTION_DIM].set(p["aw3"])                 # actor head
    w3 = w3.at[HIDDEN:, VALUE_LANE:VALUE_LANE + 1].set(p["cw3"])   # critic head
    b3 = jnp.zeros((1, LANES), jnp.float32)
    b3 = b3.at[:, :ACTION_DIM].set(p["ab3"])
    b3 = b3.at[:, VALUE_LANE:VALUE_LANE + 1].set(p["cb3"])
    return dict(w1=w1.astype(jnp.bfloat16), b1=b1,
                w2=w2.astype(jnp.bfloat16), b2=b2,
                w3=w3.astype(jnp.bfloat16), b3=b3)


# ----------------------- pure-JAX reference (sanity) ------------------------
def reference_evaluate(state, action, action_var, p):
    hp = lax.Precision.HIGHEST
    q = lambda w: w.astype(jnp.bfloat16).astype(jnp.float32)  # match bf16 wts
    h = jnp.tanh(jnp.dot(state, q(p["aw1"]), precision=hp) + p["ab1"])
    h = jnp.tanh(jnp.dot(h, q(p["aw2"]), precision=hp) + p["ab2"])
    mean = jnp.tanh(jnp.dot(h, q(p["aw3"]), precision=hp) + p["ab3"])
    c = jnp.tanh(jnp.dot(state, q(p["cw1"]), precision=hp) + p["cb1"])
    c = jnp.tanh(jnp.dot(c, q(p["cw2"]), precision=hp) + p["cb2"])
    value = jnp.dot(c, q(p["cw3"]), precision=hp) + p["cb3"]
    diff = action - mean
    logdet = jnp.sum(jnp.log(action_var))
    log_two_pi = jnp.log(2.0 * jnp.pi)
    quad = jnp.sum(diff * diff / action_var, axis=-1, keepdims=True)
    logprob = -0.5 * (quad + ACTION_DIM * log_two_pi + logdet)
    entropy = 0.5 * (ACTION_DIM * (1.0 + log_two_pi) + logdet)
    entropy = jnp.full((state.shape[0], 1), entropy, jnp.float32)
    return mean, logprob, value, entropy


if __name__ == "__main__":
    key = jax.random.PRNGKey(0)
    k_params, k_state, k_action = jax.random.split(key, 3)

    params = make_params(k_params)
    fused = fuse_params(params)
    state = jax.random.normal(k_state, (BATCH, STATE_DIM), jnp.float32)
    action = jax.random.normal(k_action, (BATCH, ACTION_DIM), jnp.float32)
    action_var = jnp.full((1, ACTION_DIM), ACTION_STD * ACTION_STD, jnp.float32)

    # TODO(synk): dist.sample() in act() needs a PRNG draw; sampling stays on
    # the host (mean + sqrt(var) * normal_noise) and is not done in-kernel.

    evaluate = jax.jit(actor_critic_evaluate)
    outs = evaluate(state, action, action_var, fused)
    outs = jax.block_until_ready(outs)
    mean, logprob, value, entropy = outs

    ref = reference_evaluate(state, action, action_var, params)
    ok = all(bool(jnp.allclose(a, b, atol=5e-2, rtol=5e-2))
             for a, b in zip(outs, ref))
    assert mean.shape == (BATCH, ACTION_DIM)
    assert logprob.shape == (BATCH, 1)
    assert value.shape == (BATCH, 1)
    assert entropy.shape == (BATCH, 1)
    assert ok, "Pallas kernel output mismatch vs JAX reference"
    print("KERNEL_OK")
</pallas_src>

<mosaic_0001>
module attributes {stable_mosaic.version = 11 : i64} {
  func.func @actor_critic_kernel(%arg0: i32, %arg1: memref<128x32xf32, #tpu.memory_space<vmem>>, %arg2: memref<128x128xf32, #tpu.memory_space<vmem>>, %arg3: memref<1x128xf32, #tpu.memory_space<vmem>>, %arg4: memref<1x1xf32, #tpu.memory_space<smem>>, %arg5: memref<32x128xbf16, #tpu.memory_space<vmem>>, %arg6: memref<1x128xf32, #tpu.memory_space<vmem>>, %arg7: memref<128x128xbf16, #tpu.memory_space<vmem>>, %arg8: memref<1x128xf32, #tpu.memory_space<vmem>>, %arg9: memref<128x128xbf16, #tpu.memory_space<vmem>>, %arg10: memref<1x128xf32, #tpu.memory_space<vmem>>, %arg11: memref<128x128xf32, #tpu.memory_space<vmem>>) attributes {dimension_semantics = [#tpu.dimension_semantics<parallel>], iteration_bounds = array<i64: 4>, scalar_prefetch = 0 : i64, scratch_operands = 0 : i64, tpu.core_type = #tpu.core_type<tc>, window_params = [{transform_indices = @transform_0, window_bounds = array<i64: 128, 32>}, {transform_indices = @transform_1, window_bounds = array<i64: 128, 128>}, {pipeline_mode = #tpu.pipeline_mode<synchronous>, transform_indices = @transform_2, window_bounds = array<i64: 1, 128>}, {transform_indices = @transform_3, window_bounds = array<i64: 1, 1>}, {pipeline_mode = #tpu.pipeline_mode<synchronous>, transform_indices = @transform_4, window_bounds = array<i64: 32, 128>}, {pipeline_mode = #tpu.pipeline_mode<synchronous>, transform_indices = @transform_5, window_bounds = array<i64: 1, 128>}, {pipeline_mode = #tpu.pipeline_mode<synchronous>, transform_indices = @transform_6, window_bounds = array<i64: 128, 128>}, {pipeline_mode = #tpu.pipeline_mode<synchronous>, transform_indices = @transform_7, window_bounds = array<i64: 1, 128>}, {pipeline_mode = #tpu.pipeline_mode<synchronous>, transform_indices = @transform_8, window_bounds = array<i64: 128, 128>}, {pipeline_mode = #tpu.pipeline_mode<synchronous>, transform_indices = @transform_9, window_bounds = array<i64: 1, 128>}, {transform_indices = @transform_10, window_bounds = array<i64: 128, 128>}]} {
    %c0 = arith.constant 0 : index
    %c0_0 = arith.constant 0 : index
    %0 = vector.load %arg1[%c0, %c0_0] : memref<128x32xf32, #tpu.memory_space<vmem>>, vector<128x32xf32>
    %1 = arith.truncf %0 : vector<128x32xf32> to vector<128x32xbf16>
    %c0_1 = arith.constant 0 : index
    %c0_2 = arith.constant 0 : index
    %2 = vector.load %arg5[%c0_1, %c0_2] : memref<32x128xbf16, #tpu.memory_space<vmem>>, vector<32x128xbf16>
    %cst = arith.constant dense<0.000000e+00> : vector<128x128xf32>
    %3 = tpu.matmul %1, %2, %cst {dimension_numbers = #tpu.dot_dimension_numbers<[1], [0], [0], [1], [0, 0, 1, 1], [], []>} : vector<128x32xbf16>, vector<32x128xbf16>, vector<128x128xf32> -> vector<128x128xf32>
    %c0_3 = arith.constant 0 : index
    %c0_4 = arith.constant 0 : index
    %4 = vector.load %arg6[%c0_3, %c0_4] : memref<1x128xf32, #tpu.memory_space<vmem>>, vector<1x128xf32>
    %5 = vector.broadcast %4 : vector<1x128xf32> to vector<128x128xf32>
    %6 = arith.addf %3, %5 : vector<128x128xf32>
    %7 = math.tanh %6 : vector<128x128xf32>
    %8 = arith.truncf %7 : vector<128x128xf32> to vector<128x128xbf16>
    %c0_5 = arith.constant 0 : index
    %c0_6 = arith.constant 0 : index
    %9 = vector.load %arg7[%c0_5, %c0_6] : memref<128x128xbf16, #tpu.memory_space<vmem>>, vector<128x128xbf16>
    %cst_7 = arith.constant dense<0.000000e+00> : vector<128x128xf32>
    %10 = tpu.matmul %8, %9, %cst_7 {dimension_numbers = #tpu.dot_dimension_numbers<[1], [0], [0], [1], [0, 0, 1, 1], [], []>} : vector<128x128xbf16>, vector<128x128xbf16>, vector<128x128xf32> -> vector<128x128xf32>
    %c0_8 = arith.constant 0 : index
    %c0_9 = arith.constant 0 : index
    %11 = vector.load %arg8[%c0_8, %c0_9] : memref<1x128xf32, #tpu.memory_space<vmem>>, vector<1x128xf32>
    %12 = vector.broadcast %11 : vector<1x128xf32> to vector<128x128xf32>
    %13 = arith.addf %10, %12 : vector<128x128xf32>
    %14 = math.tanh %13 : vector<128x128xf32>
    %15 = arith.truncf %14 : vector<128x128xf32> to vector<128x128xbf16>
    %c0_10 = arith.constant 0 : index
    %c0_11 = arith.constant 0 : index
    %16 = vector.load %arg9[%c0_10, %c0_11] : memref<128x128xbf16, #tpu.memory_space<vmem>>, vector<128x128xbf16>
    %cst_12 = arith.constant dense<0.000000e+00> : vector<128x128xf32>
    %17 = tpu.matmul %15, %16, %cst_12 {dimension_numbers = #tpu.dot_dimension_numbers<[1], [0], [0], [1], [0, 0, 1, 1], [], []>} : vector<128x128xbf16>, vector<128x128xbf16>, vector<128x128xf32> -> vector<128x128xf32>
    %c0_13 = arith.constant 0 : index
    %c0_14 = arith.constant 0 : index
    %18 = vector.load %arg10[%c0_13, %c0_14] : memref<1x128xf32, #tpu.memory_space<vmem>>, vector<1x128xf32>
    %19 = vector.broadcast %18 : vector<1x128xf32> to vector<128x128xf32>
    %20 = arith.addf %17, %19 : vector<128x128xf32>
    %21 = tpu.iota {dimensions = array<i32: 1>} : vector<128x128xi32>
    %c4_i32 = arith.constant 4 : i32
    %22 = vector.broadcast %c4_i32 : i32 to vector<128x128xi32>
    %23 = arith.cmpi slt, %21, %22 : vector<128x128xi32>
    %24 = math.tanh %20 : vector<128x128xf32>
    %25 = arith.select %23, %24, %20 : vector<128x128xi1>, vector<128x128xf32>
    %c0_15 = arith.constant 0 : index
    %c0_16 = arith.constant 0 : index
    %26 = vector.load %arg2[%c0_15, %c0_16] : memref<128x128xf32, #tpu.memory_space<vmem>>, vector<128x128xf32>
    %27 = arith.subf %26, %25 : vector<128x128xf32>
    %28 = arith.mulf %27, %27 : vector<128x128xf32>
    %c0_17 = arith.constant 0 : index
    %c0_18 = arith.constant 0 : index
    %29 = vector.load %arg3[%c0_17, %c0_18] : memref<1x128xf32, #tpu.memory_space<vmem>>, vector<1x128xf32>
    %30 = vector.broadcast %29 : vector<1x128xf32> to vector<128x128xf32>
    %31 = arith.mulf %28, %30 : vector<128x128xf32>
    %cst_19 = arith.constant dense<0.000000e+00> : vector<128xf32>
    %32 = vector.multi_reduction <add>, %31, %cst_19 [1] : vector<128x128xf32> to vector<128xf32>
    %33 = vector.shape_cast %32 : vector<128xf32> to vector<128x1xf32>
    %c0_20 = arith.constant 0 : index
    %c0_21 = arith.constant 0 : index
    %34 = memref.load %arg4[%c0_20, %c0_21] : memref<1x1xf32, #tpu.memory_space<smem>>
    %35 = vector.broadcast %34 : f32 to vector<128x1xf32>
    %36 = arith.addf %33, %35 : vector<128x1xf32>
    %cst_22 = arith.constant -5.000000e-01 : f32
    %37 = vector.broadcast %cst_22 : f32 to vector<128x1xf32>
    %38 = arith.mulf %37, %36 : vector<128x1xf32>
    %c4_i32_23 = arith.constant 4 : i32
    %39 = vector.broadcast %c4_i32_23 : i32 to vector<128x128xi32>
    %40 = arith.cmpi eq, %21, %39 : vector<128x128xi32>
    %41 = vector.shape_cast %38 : vector<128x1xf32> to vector<128x1xf32>
    %42 = vector.broadcast %41 : vector<128x1xf32> to vector<128x128xf32>
    %43 = arith.select %40, %42, %25 : vector<128x128xi1>, vector<128x128xf32>
    %c0_24 = arith.constant 0 : index
    %c0_25 = arith.constant 0 : index
    %44 = vector.load %arg11[%c0_24, %c0_25] : memref<128x128xf32, #tpu.memory_space<vmem>>, vector<128x128xf32>
    tpu.vector_store %arg11[%c0_24, %c0_25], %43 {strides = array<i32>} : memref<128x128xf32, #tpu.memory_space<vmem>>, vector<128x128xf32>,
    return
  }
  func.func @transform_0(%arg0: i32) -> (i32, i32) {
    %c0_i32 = arith.constant 0 : i32
    %c0_i32_0 = arith.constant 0 : i32
    return %arg0, %c0_i32 : i32, i32
  }
  func.func @transform_1(%arg0: i32) -> (i32, i32) {
    %c0_i32 = arith.constant 0 : i32
    %c0_i32_0 = arith.constant 0 : i32
    return %arg0, %c0_i32 : i32, i32
  }
  func.func @transform_2(%arg0: i32) -> (i32, i32) {
    %c0_i32 = arith.constant 0 : i32
    %c0_i32_0 = arith.constant 0 : i32
    %c0_i32_1 = arith.constant 0 : i32
    return %c0_i32, %c0_i32_0 : i32, i32
  }
  func.func @transform_3(%arg0: i32) -> (i32, i32) {
    %c0_i32 = arith.constant 0 : i32
    %c0_i32_0 = arith.constant 0 : i32
    %c0_i32_1 = arith.constant 0 : i32
    return %c0_i32, %c0_i32_0 : i32, i32
  }
  func.func @transform_4(%arg0: i32) -> (i32, i32) {
    %c0_i32 = arith.constant 0 : i32
    %c0_i32_0 = arith.constant 0 : i32
    %c0_i32_1 = arith.constant 0 : i32
    return %c0_i32, %c0_i32_0 : i32, i32
  }
  func.func @transform_5(%arg0: i32) -> (i32, i32) {
    %c0_i32 = arith.constant 0 : i32
    %c0_i32_0 = arith.constant 0 : i32
    %c0_i32_1 = arith.constant 0 : i32
    return %c0_i32, %c0_i32_0 : i32, i32
  }
  func.func @transform_6(%arg0: i32) -> (i32, i32) {
    %c0_i32 = arith.constant 0 : i32
    %c0_i32_0 = arith.constant 0 : i32
    %c0_i32_1 = arith.constant 0 : i32
    return %c0_i32, %c0_i32_0 : i32, i32
  }
  func.func @transform_7(%arg0: i32) -> (i32, i32) {
    %c0_i32 = arith.constant 0 : i32
    %c0_i32_0 = arith.constant 0 : i32
    %c0_i32_1 = arith.constant 0 : i32
    return %c0_i32, %c0_i32_0 : i32, i32
  }
  func.func @transform_8(%arg0: i32) -> (i32, i32) {
    %c0_i32 = arith.constant 0 : i32
    %c0_i32_0 = arith.constant 0 : i32
    %c0_i32_1 = arith.constant 0 : i32
    return %c0_i32, %c0_i32_0 : i32, i32
  }
  func.func @transform_9(%arg0: i32) -> (i32, i32) {
    %c0_i32 = arith.constant 0 : i32
    %c0_i32_0 = arith.constant 0 : i32
    %c0_i32_1 = arith.constant 0 : i32
    return %c0_i32, %c0_i32_0 : i32, i32
  }
  func.func @transform_10(%arg0: i32) -> (i32, i32) {
    %c0_i32 = arith.constant 0 : i32
    %c0_i32_0 = arith.constant 0 : i32
    return %arg0, %c0_i32 : i32, i32
  }
}

</mosaic_0001>

<llo_original>
// kernel: actor_critic_evaluate.1
$region0: #{actor_critic_evaluate.1}
  #allocation0 [shape = 'u32[]', space=smem, size = 0x4, offset = 0x4, fixed_abs, tag = 'smem constant byte address 0x4 - core index']
  #allocation1 [shape = 'u32[144,128]{1,0:T(1,128)}', space=vmem, size = 0x12000, scoped, tag = 'internal scratch']
  #allocation2 [shape = 'f32[1,1]{1,0:T(1,128)S(6)}', space=smem, size = 0x200, scoped, tag = 'scoped memory for actor_critic_evaluate.1']
  %s0 = inlined_call_operand.vmem [shape: f32[512,32], index: 0, kind: input, shape index: {}]
  %s1 = inlined_call_operand.vmem [shape: f32[512,128], index: 1, kind: input, shape index: {}]
  %s2 = inlined_call_operand.vmem [shape: f32[1,128], index: 2, kind: input, shape index: {}]
  %s3 = inlined_call_operand.<no memory space> [shape: f32[1,1], index: 3, kind: input, shape index: {}]
  %s4 = inlined_call_operand.vmem [shape: bf16[32,128], index: 4, kind: input, shape index: {}]
  %s5 = inlined_call_operand.vmem [shape: f32[1,128], index: 5, kind: input, shape index: {}]
  %s6 = inlined_call_operand.vmem [shape: bf16[128,128], index: 6, kind: input, shape index: {}]
  %s7 = inlined_call_operand.vmem [shape: f32[1,128], index: 7, kind: input, shape index: {}]
  %s8 = inlined_call_operand.vmem [shape: bf16[128,128], index: 8, kind: input, shape index: {}]
  %s9 = inlined_call_operand.vmem [shape: f32[1,128], index: 9, kind: input, shape index: {}]
  %s10 = inlined_call_operand.vmem [shape: f32[512,128], index: 10, kind: output, shape index: {}]
  %s11 = sld [smem:[#allocation0]]
  $region73: #{actor_critic_evaluate.1} parent=0
    _
  %s13 = ssub.s32 1, %s11
  %s14 = scalar_select 0, %s13, %s11
  %15 = sst [smem:[#allocation2]] %s3
  loop: start=0, step=1, limit=6
  $region2: #{actor_critic_evaluate.1} parent=0 // loop_pre_header
    _
  $region3: #{actor_critic_evaluate.1} parent=0 // loop_header
    %s17 = sphi 0, %s21
    %p18 = scmp.ge.s32.totalorder %s17, 6
    %s27 = sphi 0, %s29
    %s30 = sphi 0, %s27
    %s31 = sphi 0, %s30
    %s47 = sphi 0, %s31
    %s53 = sphi 0, %s55
    %s56 = sphi 0, %s53
    %s57 = sphi 0, %s56
    %s73 = sphi 0, %s57
    %s77 = sphi 0, %s77
    %s79 = sphi 0, %s77
    %s80 = sphi 0, %s79
    %s94 = sphi 0, %s80
    %s98 = sphi 0, %s98
    %s100 = sphi 0, %s98
    %s101 = sphi 0, %s100
    %s115 = sphi 0, %s101
    %s119 = sphi 0, %s119
    %s121 = sphi 0, %s119
    %s122 = sphi 0, %s121
    %s136 = sphi 0, %s122
    %s140 = sphi 0, %s140
    %s142 = sphi 0, %s140
    %s143 = sphi 0, %s142
    %s157 = sphi 0, %s143
    %s161 = sphi 0, %s161
    %s163 = sphi 0, %s161
    %s164 = sphi 0, %s163
    %s178 = sphi 0, %s164
    %s182 = sphi 0, %s182
    %s184 = sphi 0, %s182
    %s185 = sphi 0, %s184
    %s199 = sphi 0, %s185
    %s203 = sphi 0, %s203
    %s205 = sphi 0, %s203
    %s206 = sphi 0, %s205
    %s220 = sphi 0, %s206
    %s224 = sphi 0, %s224
    %s226 = sphi 0, %s224
    %s227 = sphi 0, %s226
    %s241 = sphi 0, %s227
    %s247 = sphi 0, %s249
    %s250 = sphi 0, %s247
    %s251 = sphi 0, %s250
    %s267 = sphi 0, %s251
  $region4: #{actor_critic_evaluate.1} parent=0 // loop_header_branch
    %20 = sbr.rel (%p18) target = $region8
  $region5: #{actor_critic_evaluate.1} parent=0 // loop_body
    %s22 = ssub.s32 %s17, 1
    %s23 = ssub.s32 %s17, 2
    %s24 = sadd.s32 %s17, 1
    %s25 = ssub.s32 %s17, %s24
    %p26 = scmp.eq.s32.totalorder %s25, 0
    %s28 = sadd.s32 %s27, 1
    %s29 = scalar_select %p26, %s27, %s28
    %p32 = pneg %p26
    %p33 = scmp.eq.s32.totalorder %s17, 3
    %p34 = por %p32, %p33
    %p35 = scmp.ne.s32.totalorder %s27, %s30
    %p36 = scmp.eq.s32.totalorder %s17, 0
    %p37 = por %p35, %p36
    %p38 = scmp.ne.s32.totalorder %s27, %s30
    %p39 = scmp.eq.s32.totalorder %s22, 3
    %p40 = por %p38, %p39
    %p41 = scmp.ne.s32.totalorder %s30, %s31
    %p42 = scmp.eq.s32.totalorder %s22, 0
    %p43 = por %p41, %p42
    %p44 = scmp.ne.s32.totalorder %s30, %s31
    %p45 = scmp.eq.s32.totalorder %s23, 3
    %p46 = por %p44, %p45
    %p48 = scmp.ne.s32.totalorder %s31, %s47
    %p49 = scmp.eq.s32.totalorder %s23, 0
    %p50 = por %p48, %p49
    %s51 = ssub.s32 %s17, %s24
    %p52 = scmp.eq.s32.totalorder %s51, 0
    %s54 = sadd.s32 %s53, 1
    %s55 = scalar_select %p52, %s53, %s54
    %p58 = pneg %p52
    %p59 = scmp.eq.s32.totalorder %s17, 3
    %p60 = por %p58, %p59
    %p61 = scmp.ne.s32.totalorder %s53, %s56
    %p62 = scmp.eq.s32.totalorder %s17, 0
    %p63 = por %p61, %p62
    %p64 = scmp.ne.s32.totalorder %s53, %s56
    %p65 = scmp.eq.s32.totalorder %s22, 3
    %p66 = por %p64, %p65
    %p67 = scmp.ne.s32.totalorder %s56, %s57
    %p68 = scmp.eq.s32.totalorder %s22, 0
    %p69 = por %p67, %p68
    %p70 = scmp.ne.s32.totalorder %s56, %s57
    %p71 = scmp.eq.s32.totalorder %s23, 3
    %p72 = por %p70, %p71
    %p74 = scmp.ne.s32.totalorder %s57, %s73
    %p75 = scmp.eq.s32.totalorder %s23, 0
    %p76 = por %p74, %p75
    %s78 = sadd.s32 %s77, 1
    %p81 = scmp.eq.s32.totalorder %s17, 3
    %p82 = scmp.ne.s32.totalorder %s77, %s79
    %p83 = scmp.eq.s32.totalorder %s17, 0
    %p84 = por %p82, %p83
    %p85 = scmp.ne.s32.totalorder %s77, %s79
    %p86 = scmp.eq.s32.totalorder %s22, 3
    %p87 = por %p85, %p86
    %p88 = scmp.ne.s32.totalorder %s79, %s80
    %p89 = scmp.eq.s32.totalorder %s22, 0
    %p90 = por %p88, %p89
    %p91 = scmp.ne.s32.totalorder %s79, %s80
    %p92 = scmp.eq.s32.totalorder %s23, 3
    %p93 = por %p91, %p92
    %p95 = scmp.ne.s32.totalorder %s80, %s94
    %p96 = scmp.eq.s32.totalorder %s23, 0
    %p97 = por %p95, %p96
    %s99 = sadd.s32 %s98, 1
    %p102 = scmp.eq.s32.totalorder %s17, 3
    %p103 = scmp.ne.s32.totalorder %s98, %s100
    %p104 = scmp.eq.s32.totalorder %s17, 0
    %p105 = por %p103, %p104
    %p106 = scmp.ne.s32.totalorder %s98, %s100
    %p107 = scmp.eq.s32.totalorder %s22, 3
    %p108 = por %p106, %p107
    %p109 = scmp.ne.s32.totalorder %s100, %s101
    %p110 = scmp.eq.s32.totalorder %s22, 0
    %p111 = por %p109, %p110
    %p112 = scmp.ne.s32.totalorder %s100, %s101
    %p113 = scmp.eq.s32.totalorder %s23, 3
    %p114 = por %p112, %p113
    %p116 = scmp.ne.s32.totalorder %s101, %s115
    %p117 = scmp.eq.s32.totalorder %s23, 0
    %p118 = por %p116, %p117
    %s120 = sadd.s32 %s119, 1
    %p123 = scmp.eq.s32.totalorder %s17, 3
    %p124 = scmp.ne.s32.totalorder %s119, %s121
    %p125 = scmp.eq.s32.totalorder %s17, 0
    %p126 = por %p124, %p125
    %p127 = scmp.ne.s32.totalorder %s119, %s121
    %p128 = scmp.eq.s32.totalorder %s22, 3
    %p129 = por %p127, %p128
    %p130 = scmp.ne.s32.totalorder %s121, %s122
    %p131 = scmp.eq.s32.totalorder %s22, 0
    %p132 = por %p130, %p131
    %p133 = scmp.ne.s32.totalorder %s121, %s122
    %p134 = scmp.eq.s32.totalorder %s23, 3
    %p135 = por %p133, %p134
    %p137 = scmp.ne.s32.totalorder %s122, %s136
    %p138 = scmp.eq.s32.totalorder %s23, 0
    %p139 = por %p137, %p138
    %s141 = sadd.s32 %s140, 1
    %p144 = scmp.eq.s32.totalorder %s17, 3
    %p145 = scmp.ne.s32.totalorder %s140, %s142
    %p146 = scmp.eq.s32.totalorder %s17, 0
    %p147 = por %p145, %p146
    %p148 = scmp.ne.s32.totalorder %s140, %s142
    %p149 = scmp.eq.s32.totalorder %s22, 3
    %p150 = por %p148, %p149
    %p151 = scmp.ne.s32.totalorder %s142, %s143
    %p152 = scmp.eq.s32.totalorder %s22, 0
    %p153 = por %p151, %p152
    %p154 = scmp.ne.s32.totalorder %s142, %s143
    %p155 = scmp.eq.s32.totalorder %s23, 3
    %p156 = por %p154, %p155
    %p158 = scmp.ne.s32.totalorder %s143, %s157
    %p159 = scmp.eq.s32.totalorder %s23, 0
    %p160 = por %p158, %p159
    %s162 = sadd.s32 %s161, 1
    %p165 = scmp.eq.s32.totalorder %s17, 3
    %p166 = scmp.ne.s32.totalorder %s161, %s163
    %p167 = scmp.eq.s32.totalorder %s17, 0
    %p168 = por %p166, %p167
    %p169 = scmp.ne.s32.totalorder %s161, %s163
    %p170 = scmp.eq.s32.totalorder %s22, 3
    %p171 = por %p169, %p170
    %p172 = scmp.ne.s32.totalorder %s163, %s164
    %p173 = scmp.eq.s32.totalorder %s22, 0
    %p174 = por %p172, %p173
    %p175 = scmp.ne.s32.totalorder %s163, %s164
    %p176 = scmp.eq.s32.totalorder %s23, 3
    %p177 = por %p175, %p176
    %p179 = scmp.ne.s32.totalorder %s164, %s178
    %p180 = scmp.eq.s32.totalorder %s23, 0
    %p181 = por %p179, %p180
    %s183 = sadd.s32 %s182, 1
    %p186 = scmp.eq.s32.totalorder %s17, 3
    %p187 = scmp.ne.s32.totalorder %s182, %s184
    %p188 = scmp.eq.s32.totalorder %s17, 0
    %p189 = por %p187, %p188
    %p190 = scmp.ne.s32.totalorder %s182, %s184
    %p191 = scmp.eq.s32.totalorder %s22, 3
    %p192 = por %p190, %p191
    %p193 = scmp.ne.s32.totalorder %s184, %s185
    %p194 = scmp.eq.s32.totalorder %s22, 0
    %p195 = por %p193, %p194
    %p196 = scmp.ne.s32.totalorder %s184, %s185
    %p197 = scmp.eq.s32.totalorder %s23, 3
    %p198 = por %p196, %p197
    %p200 = scmp.ne.s32.totalorder %s185, %s199
    %p201 = scmp.eq.s32.totalorder %s23, 0
    %p202 = por %p200, %p201
    %s204 = sadd.s32 %s203, 1
    %p207 = scmp.eq.s32.totalorder %s17, 3
    %p208 = scmp.ne.s32.totalorder %s203, %s205
    %p209 = scmp.eq.s32.totalorder %s17, 0
    %p210 = por %p208, %p209
    %p211 = scmp.ne.s32.totalorder %s203, %s205
    %p212 = scmp.eq.s32.totalorder %s22, 3
    %p213 = por %p211, %p212
    %p214 = scmp.ne.s32.totalorder %s205, %s206
    %p215 = scmp.eq.s32.totalorder %s22, 0
    %p216 = por %p214, %p215
    %p217 = scmp.ne.s32.totalorder %s205, %s206
    %p218 = scmp.eq.s32.totalorder %s23, 3
    %p219 = por %p217, %p218
    %p221 = scmp.ne.s32.totalorder %s206, %s220
    %p222 = scmp.eq.s32.totalorder %s23, 0
    %p223 = por %p221, %p222
    %s225 = sadd.s32 %s224, 1
    %p228 = scmp.eq.s32.totalorder %s17, 3
    %p229 = scmp.ne.s32.totalorder %s224, %s226
    %p230 = scmp.eq.s32.totalorder %s17, 0
    %p231 = por %p229, %p230
    %p232 = scmp.ne.s32.totalorder %s224, %s226
    %p233 = scmp.eq.s32.totalorder %s22, 3
    %p234 = por %p232, %p233
    %p235 = scmp.ne.s32.totalorder %s226, %s227
    %p236 = scmp.eq.s32.totalorder %s22, 0
    %p237 = por %p235, %p236
    %p238 = scmp.ne.s32.totalorder %s226, %s227
    %p239 = scmp.eq.s32.totalorder %s23, 3
    %p240 = por %p238, %p239
    %p242 = scmp.ne.s32.totalorder %s227, %s241
    %p243 = scmp.eq.s32.totalorder %s23, 0
    %p244 = por %p242, %p243
    %s245 = ssub.s32 %s17, %s24
    %p246 = scmp.eq.s32.totalorder %s245, 0
    %s248 = sadd.s32 %s247, 1
    %s249 = scalar_select %p246, %s247, %s248
    %p252 = pneg %p246
    %p253 = scmp.eq.s32.totalorder %s17, 3
    %p254 = por %p252, %p253
    %p255 = scmp.ne.s32.totalorder %s247, %s250
    %p256 = scmp.eq.s32.totalorder %s17, 0
    %p257 = por %p255, %p256
    %p258 = scmp.ne.s32.totalorder %s247, %s250
    %p259 = scmp.eq.s32.totalorder %s22, 3
    %p260 = por %p258, %p259
    %p261 = scmp.ne.s32.totalorder %s250, %s251
    %p262 = scmp.eq.s32.totalorder %s22, 0
    %p263 = por %p261, %p262
    %p264 = scmp.ne.s32.totalorder %s250, %s251
    %p265 = scmp.eq.s32.totalorder %s23, 3
    %p266 = por %p264, %p265
    %p268 = scmp.ne.s32.totalorder %s251, %s267
    %p269 = scmp.eq.s32.totalorder %s23, 0
    %p270 = por %p268, %p269
    %p271 = scmp.le.s32.totalorder 1, %s17
    %p272 = scmp.lt.s32.totalorder %s17, 5
    %p273 = pnand %p271, %p272
    %p274 = pneg %p273
    // Predicated region
    $region9: #{actor_critic_evaluate.1} parent=5 // pred_check
      _
    $region10: #{actor_critic_evaluate.1} parent=5 // pred_check_branch
      %276 = sbr.rel (%p273) target = $region12
    $region11: #{actor_critic_evaluate.1} parent=5 // pred_region
      %s277 = ssub.s32 %s17, 1
      // Predicated region
      $region13: #{actor_critic_evaluate.1} parent=11 // pred_check
        %p278 = pneg %p90
      $region14: #{actor_critic_evaluate.1} parent=11 // pred_check_branch
        %280 = sbr.rel (%p278) target = $region16
      $region15: #{actor_critic_evaluate.1} parent=11 // pred_region
        _
      $region16: #{actor_critic_evaluate.1} parent=11 // pred_fallthru
        _
      // Predicated region
      $region17: #{actor_critic_evaluate.1} parent=11 // pred_check
        %p281 = pneg %p111
      $region18: #{actor_critic_evaluate.1} parent=11 // pred_check_branch
        %283 = sbr.rel (%p281) target = $region20
      $region19: #{actor_critic_evaluate.1} parent=11 // pred_region
        _
      $region20: #{actor_critic_evaluate.1} parent=11 // pred_fallthru
        _
      // Predicated region
      $region21: #{actor_critic_evaluate.1} parent=11 // pred_check
        %p284 = pneg %p132
      $region22: #{actor_critic_evaluate.1} parent=11 // pred_check_branch
        %286 = sbr.rel (%p284) target = $region24
      $region23: #{actor_critic_evaluate.1} parent=11 // pred_region
        _
      $region24: #{actor_critic_evaluate.1} parent=11 // pred_fallthru
        _
      // Predicated region
      $region25: #{actor_critic_evaluate.1} parent=11 // pred_check
        %p287 = pneg %p153
      $region26: #{actor_critic_evaluate.1} parent=11 // pred_check_branch
        %289 = sbr.rel (%p287) target = $region28
      $region27: #{actor_critic_evaluate.1} parent=11 // pred_region
        _
      $region28: #{actor_critic_evaluate.1} parent=11 // pred_fallthru
        _
      // Predicated region
      $region29: #{actor_critic_evaluate.1} parent=11 // pred_check
        %p290 = pneg %p174
      $region30: #{actor_critic_evaluate.1} parent=11 // pred_check_branch
        %292 = sbr.rel (%p290) target = $region32
      $region31: #{actor_critic_evaluate.1} parent=11 // pred_region
        _
      $region32: #{actor_critic_evaluate.1} parent=11 // pred_fallthru
        _
      // Predicated region
      $region33: #{actor_critic_evaluate.1} parent=11 // pred_check
        %p293 = pneg %p195
      $region34: #{actor_critic_evaluate.1} parent=11 // pred_check_branch
        %295 = sbr.rel (%p293) target = $region36
      $region35: #{actor_critic_evaluate.1} parent=11 // pred_region
        _
      $region36: #{actor_critic_evaluate.1} parent=11 // pred_fallthru
        _
      // Predicated region
      $region37: #{actor_critic_evaluate.1} parent=11 // pred_check
        %p296 = pneg %p216
      $region38: #{actor_critic_evaluate.1} parent=11 // pred_check_branch
        %298 = sbr.rel (%p296) target = $region40
      $region39: #{actor_critic_evaluate.1} parent=11 // pred_region
        _
      $region40: #{actor_critic_evaluate.1} parent=11 // pred_fallthru
        _
      // Predicated region
      $region41: #{actor_critic_evaluate.1} parent=11 // pred_check
        %p299 = pneg %p237
      $region42: #{actor_critic_evaluate.1} parent=11 // pred_check_branch
        %301 = sbr.rel (%p299) target = $region44
      $region43: #{actor_critic_evaluate.1} parent=11 // pred_region
        _
      $region44: #{actor_critic_evaluate.1} parent=11 // pred_fallthru
        _
    $region12: #{actor_critic_evaluate.1} parent=5 // pred_fallthru
      _
    %p302 = scmp.lt.s32.totalorder %s17, 4
    // Predicated region
    $region45: #{actor_critic_evaluate.1} parent=5 // pred_check
      %p303 = pneg %p302
    $region46: #{actor_critic_evaluate.1} parent=5 // pred_check_branch
      %305 = sbr.rel (%p303) target = $region48
    $region47: #{actor_critic_evaluate.1} parent=5 // pred_region
      // Predicated region
      $region49: #{actor_critic_evaluate.1} parent=47 // pred_check
        %p306 = pneg %p37
      $region50: #{actor_critic_evaluate.1} parent=47 // pred_check_branch
        %308 = sbr.rel (%p306) target = $region52
      $region51: #{actor_critic_evaluate.1} parent=47 // pred_region
        %s309 = smul.u32 16, %s17
        %p310 = scmp.lt.s32.totalorder %s309, 63
        %s311 = scalar_select %p310, %s309, 63
        %s312 = smul.addr %s311, 8
        %s313 = scalar_lea.vmem %s0, %s312
        %s314 = smul.u32 16, %s17
      $region52: #{actor_critic_evaluate.1} parent=47 // pred_fallthru
        _
      // Predicated region
      $region53: #{actor_critic_evaluate.1} parent=47 // pred_check
        %p315 = pneg %p63
      $region54: #{actor_critic_evaluate.1} parent=47 // pred_check_branch
        %317 = sbr.rel (%p315) target = $region56
      $region55: #{actor_critic_evaluate.1} parent=47 // pred_region
        %s318 = smul.u32 16, %s17
        %p319 = scmp.lt.s32.totalorder %s318, 63
        %s320 = scalar_select %p319, %s318, 63
        %s321 = smul.addr %s320, 8
        %s322 = scalar_lea.vmem %s1, %s321
        %s323 = smul.u32 16, %s17
      $region56: #{actor_critic_evaluate.1} parent=47 // pred_fallthru
        _
    $region48: #{actor_critic_evaluate.1} parent=5 // pred_fallthru
      _
    %p324 = scmp.le.s32.totalorder 1, %s17
    %p325 = scmp.lt.s32.totalorder %s17, 5
    %p326 = pnand %p324, %p325
    %p327 = pneg %p326
    // Predicated region
    $region57: #{actor_critic_evaluate.1} parent=5 // pred_check
      _
    $region58: #{actor_critic_evaluate.1} parent=5 // pred_check_branch
      %329 = sbr.rel (%p326) target = $region60
    $region59: #{actor_critic_evaluate.1} parent=5 // pred_region
      %s330 = ssub.s32 %s17, 1
      %s331 = smul.u32 16, %s22
      %p332 = scmp.lt.s32.totalorder %s331, 63
      %s333 = scalar_select %p332, %s331, 63
      %s334 = smul.addr %s333, 8
      %s335 = scalar_lea.vmem %s0, %s334
      %p336 = pneg %p43
      %p337 = pneg %p40
      %s338 = smul.u32 16, %s22
      %p339 = scmp.lt.s32.totalorder %s338, 63
      %s340 = scalar_select %p339, %s338, 63
      %s341 = smul.addr %s340, 8
      %s342 = scalar_lea.vmem %s1, %s341
      %p343 = pneg %p69
      %p344 = pneg %p66
      %p345 = pneg %p90
      %p346 = pneg %p87
      %p347 = pneg %p111
      %p348 = pneg %p108
      %p349 = pneg %p132
      %p350 = pneg %p129
      %p351 = pneg %p153
      %p352 = pneg %p150
      %p353 = pneg %p174
      %p354 = pneg %p171
      %p355 = pneg %p195
      %p356 = pneg %p192
      %p357 = pneg %p216
      %p358 = pneg %p213
      %p359 = pneg %p237
      %p360 = pneg %p234
      %p361 = pneg %p263
      %p362 = pneg %p260
      %s363 = smul.u32 16, %s22
      %p364 = scmp.lt.s32.totalorder %s363, 63
      %s365 = scalar_select %p364, %s363, 63
      %s366 = smul.addr %s365, 8
      %s367 = scalar_lea.vmem %s10, %s366
      %s368 = smul.u32 16, %s22
      %p369 = scmp.lt.s32.totalorder %s368, 63
      %s370 = scalar_select %p369, %s368, 63
      %s371 = smul.addr %s370, 8
      %s372 = scalar_lea.vmem %s0, %s371
      %s373 = smul.u32 16, %s22
      %s374 = smul.u32 16, %s22
      %p375 = scmp.lt.s32.totalorder %s374, 63
      %s376 = scalar_select %p375, %s374, 63
      %s377 = smul.addr %s376, 8
      %s378 = scalar_lea.vmem %s1, %s377
      %s379 = smul.u32 16, %s22
      %s380 = smul.u32 16, %s22
      %p381 = scmp.lt.s32.totalorder %s380, 63
      %s382 = scalar_select %p381, %s380, 63
      %s383 = smul.addr %s382, 8
      %s384 = scalar_lea.vmem %s10, %s383
      %s385 = smul.u32 16, %s22
      %v387 = vld [vmem:[%s372] sm:$0xff]
      %v388 = vld [vmem:[%s372 + $0x8] sm:$0xff]
      %v389 = vld [vmem:[%s372 + $0x10] sm:$0xff]
      %v390 = vld [vmem:[%s372 + $0x18] sm:$0xff]
      %v391 = vld [vmem:[%s372 + $0x20] sm:$0xff]
      %v392 = vld [vmem:[%s372 + $0x28] sm:$0xff]
      %v393 = vld [vmem:[%s372 + $0x30] sm:$0xff]
      %v394 = vld [vmem:[%s372 + $0x38] sm:$0xff]
      %v395 = vld [vmem:[%s372 + $0x40] sm:$0xff]
      %v396 = vld [vmem:[%s372 + $0x48] sm:$0xff]
      %v397 = vld [vmem:[%s372 + $0x50] sm:$0xff]
      %v398 = vld [vmem:[%s372 + $0x58] sm:$0xff]
      %v399 = vld [vmem:[%s372 + $0x60] sm:$0xff]
      %v400 = vld [vmem:[%s372 + $0x68] sm:$0xff]
      %v401 = vld [vmem:[%s372 + $0x70] sm:$0xff]
      %v402 = vld [vmem:[%s372 + $0x78] sm:$0xff]
      %v403 = vpack.c.bf16 %v388, %v387
      %v404 = vpack.c.bf16 %v390, %v389
      %v405 = vpack.c.bf16 %v392, %v391
      %v406 = vpack.c.bf16 %v394, %v393
      %v407 = vpack.c.bf16 %v396, %v395
      %v408 = vpack.c.bf16 %v398, %v397
      %v409 = vpack.c.bf16 %v400, %v399
      %v410 = vpack.c.bf16 %v402, %v401
      %v411 = vld [vmem:[%s4] sm:$0xf]
      %v412 = vld [vmem:[%s4 + $0x4] sm:$0xf]
      %v413 = vld [vmem:[%s4 + $0x8] sm:$0xf]
      %v414 = vld [vmem:[%s4 + $0xc] sm:$0xf]
      %v415 = vld [vmem:[%s5] sm:$0x1]
      %v417 = vlaneseq
      %v418 = vshrl.u32 %v417, 7
      %v419 = vsub.s32 0, %v418
      %v420 = vrot.slane %v415, %v419
      %v426 = vunpack.c.l.b16 %v411
      %v427 = vunpack.c.l.b16 %v412
      %v428 = vunpack.c.l.b16 %v413
      %v429 = vunpack.c.l.b16 %v414
      %v430 = vpack.c.b16 %v427, %v426
      %v431 = vpack.c.b16 %v429, %v428
      %vm434 = vcmask 261120
      %v436 = vsel %vm434, %v403, 0
      %v439 = vsel %vm434, %v404, 0
      %v442 = vsel %vm434, %v405, 0
      %v445 = vsel %vm434, %v406, 0
      %v448 = vsel %vm434, %v407, 0
      %v451 = vsel %vm434, %v408, 0
      %v454 = vsel %vm434, %v409, 0
      %v457 = vsel %vm434, %v410, 0
      %459 = vmatprep.subr.bf16.mxu0 0
      %460 = vmatpush1.bf16.msra.mxu0 %v430
      %461 = vmatprep.subr.bf16.mxu0 0
      %462 = vmatpush1.bf16.msra.mxu0 %v431
      %463 = vmatprep.subr.bf16.mxu0 0
      %464 = vmatpush1.bf16.msra.mxu0 0
      %465 = vmatprep.subr.bf16.mxu0 0
      %466 = vmatpush1.bf16.msra.mxu0 0
      %467 = vmatprep.subr.bf16.mxu0 0
      %468 = vmatpush1.bf16.msra.mxu0 0
      %469 = vmatprep.subr.bf16.mxu0 0
      %470 = vmatpush1.bf16.msra.mxu0 0
      %471 = vmatprep.subr.bf16.mxu0 0
      %472 = vmatpush1.bf16.msra.mxu0 0
      %473 = vmatprep.subr.bf16.mxu0 0
      %474 = vmatpush1.bf16.msra.mxu0 0
      %475 = vmatprep.subr.bf16.mxu0 0
      %476 = vmatpush1.bf16.msra.mxu0 0
      %477 = vmatprep.subr.bf16.mxu0 0
      %478 = vmatpush1.bf16.msra.mxu0 0
      %479 = vmatprep.subr.bf16.mxu0 0
      %480 = vmatpush1.bf16.msra.mxu0 0
      %481 = vmatprep.subr.bf16.mxu0 0
      %482 = vmatpush1.bf16.msra.mxu0 0
      %483 = vmatprep.subr.bf16.mxu0 0
      %484 = vmatpush1.bf16.msra.mxu0 0
      %485 = vmatprep.subr.bf16.mxu0 0
      %486 = vmatpush1.bf16.msra.mxu0 0
      %487 = vmatprep.subr.bf16.mxu0 0
      %488 = vmatpush1.bf16.msra.mxu0 0
      %489 = vmatprep.subr.bf16.mxu0 0
      %490 = vmatpush1.bf16.msra.mxu0 0
      %491 = vmatprep.mubr.bf16.mxu0 0
      %492 = vmatmul.mubr.bf16.gmra.mrb[0].mxu0 %v436
      %v493 = vpop.f32.mrb[0].mxu0
      %v494 = vadd.f32 %v420, %v493
      %v495 = vpop.f32.mrb[0].mxu0
      %v496 = vpop.f32.mrb[0].mxu0
      %v497 = vadd.f32 %v420, %v496
      %v498 = vpop.f32.mrb[0].mxu0
      %499 = vmatprep.mubr.bf16.mxu0 0
      %500 = vmatmul.mubr.bf16.gmra.mrb[0].mxu0 %v439
      %v501 = vpop.f32.mrb[0].mxu0
      %v502 = vadd.f32 %v420, %v501
      %v503 = vpop.f32.mrb[0].mxu0
      %v504 = vpop.f32.mrb[0].mxu0
      %v505 = vadd.f32 %v420, %v504
      %v506 = vpop.f32.mrb[0].mxu0
      %507 = vmatprep.mubr.bf16.mxu0 0
      %508 = vmatmul.mubr.bf16.gmra.mrb[0].mxu0 %v442
      %v509 = vpop.f32.mrb[0].mxu0
      %v510 = vadd.f32 %v420, %v509
      %v511 = vpop.f32.mrb[0].mxu0
      %v512 = vpop.f32.mrb[0].mxu0
      %v513 = vadd.f32 %v420, %v512
      %v514 = vpop.f32.mrb[0].mxu0
      %515 = vmatprep.mubr.bf16.mxu0 0
      %516 = vmatmul.mubr.bf16.gmra.mrb[0].mxu0 %v445
      %v517 = vpop.f32.mrb[0].mxu0
      %v518 = vadd.f32 %v420, %v517
      %v519 = vpop.f32.mrb[0].mxu0
      %v520 = vpop.f32.mrb[0].mxu0
      %v521 = vadd.f32 %v420, %v520
      %v522 = vpop.f32.mrb[0].mxu0
      %523 = vmatprep.mubr.bf16.mxu0 0
      %524 = vmatmul.mubr.bf16.gmra.mrb[0].mxu0 %v448
      %v525 = vpop.f32.mrb[0].mxu0
      %v526 = vadd.f32 %v420, %v525
      %v527 = vpop.f32.mrb[0].mxu0
      %v528 = vpop.f32.mrb[0].mxu0
      %v529 = vadd.f32 %v420, %v528
      %v530 = vpop.f32.mrb[0].mxu0
      %531 = vmatprep.mubr.bf16.mxu0 0
      %532 = vmatmul.mubr.bf16.gmra.mrb[0].mxu0 %v451
      %v533 = vpop.f32.mrb[0].mxu0
      %v534 = vadd.f32 %v420, %v533
      %v535 = vpop.f32.mrb[0].mxu0
      %v536 = vpop.f32.mrb[0].mxu0
      %v537 = vadd.f32 %v420, %v536
      %v538 = vpop.f32.mrb[0].mxu0
      %539 = vmatprep.mubr.bf16.mxu0 0
      %540 = vmatmul.mubr.bf16.gmra.mrb[0].mxu0 %v454
      %v541 = vpop.f32.mrb[0].mxu0
      %v542 = vadd.f32 %v420, %v541
      %v543 = vpop.f32.mrb[0].mxu0
      %v544 = vpop.f32.mrb[0].mxu0
      %v545 = vadd.f32 %v420, %v544
      %v546 = vpop.f32.mrb[0].mxu0
      %547 = vmatprep.mubr.bf16.mxu0 0
      %548 = vmatmul.mubr.bf16.gmra.mrb[0].mxu0 %v457
      %v549 = vpop.f32.mrb[0].mxu0
      %v550 = vadd.f32 %v420, %v549
      %v551 = vpop.f32.mrb[0].mxu0
      %v552 = vpop.f32.mrb[0].mxu0
      %v553 = vadd.f32 %v420, %v552
      %v554 = vpop.f32.mrb[0].mxu0
      %555 = vdwg.mxu0
      %v556 = vtanh.pop %v494
      %v557 = vtanh.pop %v497
      %v558 = vtanh.pop %v502
      %v559 = vtanh.pop %v505
      %v560 = vtanh.pop %v510
      %v561 = vtanh.pop %v513
      %v562 = vtanh.pop %v518
      %v563 = vtanh.pop %v521
      %v564 = vtanh.pop %v526
      %v565 = vtanh.pop %v529
      %v566 = vtanh.pop %v534
      %v567 = vtanh.pop %v537
      %v568 = vtanh.pop %v542
      %v569 = vtanh.pop %v545
      %v570 = vtanh.pop %v550
      %v571 = vtanh.pop %v553
      %v572 = vpack.c.bf16 %v557, %v556
      %v573 = vpack.c.bf16 %v559, %v558
      %v574 = vpack.c.bf16 %v561, %v560
      %v575 = vpack.c.bf16 %v563, %v562
      %v576 = vpack.c.bf16 %v565, %v564
      %v577 = vpack.c.bf16 %v567, %v566
      %v578 = vpack.c.bf16 %v569, %v568
      %v579 = vpack.c.bf16 %v571, %v570
      %v580 = vld [vmem:[%s6] sm:$0xf]
      %v581 = vld [vmem:[%s6 + $0x4] sm:$0xf]
      %v582 = vld [vmem:[%s6 + $0x8] sm:$0xf]
      %v583 = vld [vmem:[%s6 + $0xc] sm:$0xf]
      %v584 = vld [vmem:[%s6 + $0x10] sm:$0xf]
      %v585 = vld [vmem:[%s6 + $0x14] sm:$0xf]
      %v586 = vld [vmem:[%s6 + $0x18] sm:$0xf]
      %v587 = vld [vmem:[%s6 + $0x1c] sm:$0xf]
      %v588 = vld [vmem:[%s6 + $0x20] sm:$0xf]
      %v589 = vld [vmem:[%s6 + $0x24] sm:$0xf]
      %v590 = vld [vmem:[%s6 + $0x28] sm:$0xf]
      %v591 = vld [vmem:[%s6 + $0x2c] sm:$0xf]
      %v592 = vld [vmem:[%s6 + $0x30] sm:$0xf]
      %v593 = vld [vmem:[%s6 + $0x34] sm:$0xf]
      %v594 = vld [vmem:[%s6 + $0x38] sm:$0xf]
      %v595 = vld [vmem:[%s6 + $0x3c] sm:$0xf]
      %v596 = vld [vmem:[%s7] sm:$0x1]
      %v598 = vlaneseq
      %v599 = vshrl.u32 %v598, 7
      %v600 = vsub.s32 0, %v599
      %v601 = vrot.slane %v596, %v600
      %v619 = vunpack.c.l.b16 %v580
      %v620 = vunpack.c.l.b16 %v581
      %v621 = vunpack.c.l.b16 %v582
      %v622 = vunpack.c.l.b16 %v583
      %v623 = vunpack.c.l.b16 %v584
      %v624 = vunpack.c.l.b16 %v585
      %v625 = vunpack.c.l.b16 %v586
      %v626 = vunpack.c.l.b16 %v587
      %v627 = vunpack.c.l.b16 %v588
      %v628 = vunpack.c.l.b16 %v589
      %v629 = vunpack.c.l.b16 %v590
      %v630 = vunpack.c.l.b16 %v591
      %v631 = vunpack.c.l.b16 %v592
      %v632 = vunpack.c.l.b16 %v593
      %v633 = vunpack.c.l.b16 %v594
      %v634 = vunpack.c.l.b16 %v595
      %v635 = vpack.c.b16 %v620, %v619
      %v636 = vpack.c.b16 %v622, %v621
      %v637 = vpack.c.b16 %v624, %v623
      %v638 = vpack.c.b16 %v626, %v625
      %v639 = vpack.c.b16 %v628, %v627
      %v640 = vpack.c.b16 %v630, %v629
      %v641 = vpack.c.b16 %v632, %v631
      %v642 = vpack.c.b16 %v634, %v633
      %651 = vmatprep.subr.bf16.mxu0 0
      %652 = vmatpush1.bf16.msra.mxu0 %v635
      %653 = vmatprep.subr.bf16.mxu0 0
      %654 = vmatpush1.bf16.msra.mxu0 %v636
      %655 = vmatprep.subr.bf16.mxu0 0
      %656 = vmatpush1.bf16.msra.mxu0 %v637
      %657 = vmatprep.subr.bf16.mxu0 0
      %658 = vmatpush1.bf16.msra.mxu0 %v638
      %659 = vmatprep.subr.bf16.mxu0 0
      %660 = vmatpush1.bf16.msra.mxu0 %v639
      %661 = vmatprep.subr.bf16.mxu0 0
      %662 = vmatpush1.bf16.msra.mxu0 %v640
      %663 = vmatprep.subr.bf16.mxu0 0
      %664 = vmatpush1.bf16.msra.mxu0 %v641
      %665 = vmatprep.subr.bf16.mxu0 0
      %666 = vmatpush1.bf16.msra.mxu0 %v642
      %667 = vmatprep.subr.bf16.mxu0 0
      %668 = vmatpush1.bf16.msra.mxu0 0
      %669 = vmatprep.subr.bf16.mxu0 0
      %670 = vmatpush1.bf16.msra.mxu0 0
      %671 = vmatprep.subr.bf16.mxu0 0
      %672 = vmatpush1.bf16.msra.mxu0 0
      %673 = vmatprep.subr.bf16.mxu0 0
      %674 = vmatpush1.bf16.msra.mxu0 0
      %675 = vmatprep.subr.bf16.mxu0 0
      %676 = vmatpush1.bf16.msra.mxu0 0
      %677 = vmatprep.subr.bf16.mxu0 0
      %678 = vmatpush1.bf16.msra.mxu0 0
      %679 = vmatprep.subr.bf16.mxu0 0
      %680 = vmatpush1.bf16.msra.mxu0 0
      %681 = vmatprep.subr.bf16.mxu0 0
      %682 = vmatpush1.bf16.msra.mxu0 0
      %683 = vmatprep.mubr.bf16.mxu0 0
      %684 = vmatmul.mubr.bf16.gmra.mrb[0].mxu0 %v572
      %v685 = vpop.f32.mrb[0].mxu0
      %v686 = vadd.f32 %v601, %v685
      %v687 = vpop.f32.mrb[0].mxu0
      %v688 = vpop.f32.mrb[0].mxu0
      %v689 = vadd.f32 %v601, %v688
      %v690 = vpop.f32.mrb[0].mxu0
      %691 = vmatprep.mubr.bf16.mxu0 0
      %692 = vmatmul.mubr.bf16.gmra.mrb[0].mxu0 %v573
      %v693 = vpop.f32.mrb[0].mxu0
      %v694 = vadd.f32 %v601, %v693
      %v695 = vpop.f32.mrb[0].mxu0
      %v696 = vpop.f32.mrb[0].mxu0
      %v697 = vadd.f32 %v601, %v696
      %v698 = vpop.f32.mrb[0].mxu0
      %699 = vmatprep.mubr.bf16.mxu0 0
      %700 = vmatmul.mubr.bf16.gmra.mrb[0].mxu0 %v574
      %v701 = vpop.f32.mrb[0].mxu0
      %v702 = vadd.f32 %v601, %v701
      %v703 = vpop.f32.mrb[0].mxu0
      %v704 = vpop.f32.mrb[0].mxu0
      %v705 = vadd.f32 %v601, %v704
      %v706 = vpop.f32.mrb[0].mxu0
      %707 = vmatprep.mubr.bf16.mxu0 0
      %708 = vmatmul.mubr.bf16.gmra.mrb[0].mxu0 %v575
      %v709 = vpop.f32.mrb[0].mxu0
      %v710 = vadd.f32 %v601, %v709
      %v711 = vpop.f32.mrb[0].mxu0
      %v712 = vpop.f32.mrb[0].mxu0
      %v713 = vadd.f32 %v601, %v712
      %v714 = vpop.f32.mrb[0].mxu0
      %715 = vmatprep.mubr.bf16.mxu0 0
      %716 = vmatmul.mubr.bf16.gmra.mrb[0].mxu0 %v576
      %v717 = vpop.f32.mrb[0].mxu0
      %v718 = vadd.f32 %v601, %v717
      %v719 = vpop.f32.mrb[0].mxu0
      %v720 = vpop.f32.mrb[0].mxu0
      %v721 = vadd.f32 %v601, %v720
      %v722 = vpop.f32.mrb[0].mxu0
      %723 = vmatprep.mubr.bf16.mxu0 0
      %724 = vmatmul.mubr.bf16.gmra.mrb[0].mxu0 %v577
      %v725 = vpop.f32.mrb[0].mxu0
      %v726 = vadd.f32 %v601, %v725
      %v727 = vpop.f32.mrb[0].mxu0
      %v728 = vpop.f32.mrb[0].mxu0
      %v729 = vadd.f32 %v601, %v728
      %v730 = vpop.f32.mrb[0].mxu0
      %731 = vmatprep.mubr.bf16.mxu0 0
      %732 = vmatmul.mubr.bf16.gmra.mrb[0].mxu0 %v578
      %v733 = vpop.f32.mrb[0].mxu0
      %v734 = vadd.f32 %v601, %v733
      %v735 = vpop.f32.mrb[0].mxu0
      %v736 = vpop.f32.mrb[0].mxu0
      %v737 = vadd.f32 %v601, %v736
      %v738 = vpop.f32.mrb[0].mxu0
      %739 = vmatprep.mubr.bf16.mxu0 0
      %740 = vmatmul.mubr.bf16.gmra.mrb[0].mxu0 %v579
      %v741 = vpop.f32.mrb[0].mxu0
      %v742 = vadd.f32 %v601, %v741
      %v743 = vpop.f32.mrb[0].mxu0
      %v744 = vpop.f32.mrb[0].mxu0
      %v745 = vadd.f32 %v601, %v744
      %v746 = vpop.f32.mrb[0].mxu0
      %747 = vdwg.mxu0
      %v748 = vtanh.pop %v686
      %v749 = vtanh.pop %v689
      %v750 = vtanh.pop %v694
      %v751 = vtanh.pop %v697
      %v752 = vtanh.pop %v702
      %v753 = vtanh.pop %v705
      %v754 = vtanh.pop %v710
      %v755 = vtanh.pop %v713
      %v756 = vtanh.pop %v718
      %v757 = vtanh.pop %v721
      %v758 = vtanh.pop %v726
      %v759 = vtanh.pop %v729
      %v760 = vtanh.pop %v734
      %v761 = vtanh.pop %v737
      %v762 = vtanh.pop %v742
      %v763 = vtanh.pop %v745
      %v764 = vpack.c.bf16 %v749, %v748
      %v765 = vpack.c.bf16 %v751, %v750
      %v766 = vpack.c.bf16 %v753, %v752
      %v767 = vpack.c.bf16 %v755, %v754
      %v768 = vpack.c.bf16 %v757, %v756
      %v769 = vpack.c.bf16 %v759, %v758
      %v770 = vpack.c.bf16 %v761, %v760
      %v771 = vpack.c.bf16 %v763, %v762
      %v772 = vld [vmem:[%s8] sm:$0xf]
      %v773 = vld [vmem:[%s8 + $0x4] sm:$0xf]
      %v774 = vld [vmem:[%s8 + $0x8] sm:$0xf]
      %v775 = vld [vmem:[%s8 + $0xc] sm:$0xf]
      %v776 = vld [vmem:[%s8 + $0x10] sm:$0xf]
      %v777 = vld [vmem:[%s8 + $0x14] sm:$0xf]
      %v778 = vld [vmem:[%s8 + $0x18] sm:$0xf]
      %v779 = vld [vmem:[%s8 + $0x1c] sm:$0xf]
      %v780 = vld [vmem:[%s8 + $0x20] sm:$0xf]
      %v781 = vld [vmem:[%s8 + $0x24] sm:$0xf]
      %v782 = vld [vmem:[%s8 + $0x28] sm:$0xf]
      %v783 = vld [vmem:[%s8 + $0x2c] sm:$0xf]
      %v784 = vld [vmem:[%s8 + $0x30] sm:$0xf]
      %v785 = vld [vmem:[%s8 + $0x34] sm:$0xf]
      %v786 = vld [vmem:[%s8 + $0x38] sm:$0xf]
      %v787 = vld [vmem:[%s8 + $0x3c] sm:$0xf]
      %v788 = vld [vmem:[%s9] sm:$0x1]
      %v790 = vlaneseq
      %v791 = vshrl.u32 %v790, 7
      %v792 = vsub.s32 0, %v791
      %v793 = vrot.slane %v788, %v792
      %v811 = vunpack.c.l.b16 %v772
      %v812 = vunpack.c.l.b16 %v773
      %v813 = vunpack.c.l.b16 %v774
      %v814 = vunpack.c.l.b16 %v775
      %v815 = vunpack.c.l.b16 %v776
      %v816 = vunpack.c.l.b16 %v777
      %v817 = vunpack.c.l.b16 %v778
      %v818 = vunpack.c.l.b16 %v779
      %v819 = vunpack.c.l.b16 %v780
      %v820 = vunpack.c.l.b16 %v781
      %v821 = vunpack.c.l.b16 %v782
      %v822 = vunpack.c.l.b16 %v783
      %v823 = vunpack.c.l.b16 %v784
      %v824 = vunpack.c.l.b16 %v785
      %v825 = vunpack.c.l.b16 %v786
      %v826 = vunpack.c.l.b16 %v787
      %v827 = vpack.c.b16 %v812, %v811
      %v828 = vpack.c.b16 %v814, %v813
      %v829 = vpack.c.b16 %v816, %v815
      %v830 = vpack.c.b16 %v818, %v817
      %v831 = vpack.c.b16 %v820, %v819
      %v832 = vpack.c.b16 %v822, %v821
      %v833 = vpack.c.b16 %v824, %v823
      %v834 = vpack.c.b16 %v826, %v825
      %843 = vmatprep.subr.bf16.mxu0 0
      %844 = vmatpush1.bf16.msra.mxu0 %v827
      %845 = vmatprep.subr.bf16.mxu0 0
      %846 = vmatpush1.bf16.msra.mxu0 %v828
      %847 = vmatprep.subr.bf16.mxu0 0
      %848 = vmatpush1.bf16.msra.mxu0 %v829
      %849 = vmatprep.subr.bf16.mxu0 0
      %850 = vmatpush1.bf16.msra.mxu0 %v830
      %851 = vmatprep.subr.bf16.mxu0 0
      %852 = vmatpush1.bf16.msra.mxu0 %v831
      %853 = vmatprep.subr.bf16.mxu0 0
      %854 = vmatpush1.bf16.msra.mxu0 %v832
      %855 = vmatprep.subr.bf16.mxu0 0
      %856 = vmatpush1.bf16.msra.mxu0 %v833
      %857 = vmatprep.subr.bf16.mxu0 0
      %858 = vmatpush1.bf16.msra.mxu0 %v834
      %859 = vmatprep.subr.bf16.mxu0 0
      %860 = vmatpush1.bf16.msra.mxu0 0
      %861 = vmatprep.subr.bf16.mxu0 0
      %862 = vmatpush1.bf16.msra.mxu0 0
      %863 = vmatprep.subr.bf16.mxu0 0
      %864 = vmatpush1.bf16.msra.mxu0 0
      %865 = vmatprep.subr.bf16.mxu0 0
      %866 = vmatpush1.bf16.msra.mxu0 0
      %867 = vmatprep.subr.bf16.mxu0 0
      %868 = vmatpush1.bf16.msra.mxu0 0
      %869 = vmatprep.subr.bf16.mxu0 0
      %870 = vmatpush1.bf16.msra.mxu0 0
      %871 = vmatprep.subr.bf16.mxu0 0
      %872 = vmatpush1.bf16.msra.mxu0 0
      %873 = vmatprep.subr.bf16.mxu0 0
      %874 = vmatpush1.bf16.msra.mxu0 0
      %875 = vmatprep.mubr.bf16.mxu0 0
      %876 = vmatmul.mubr.bf16.gmra.mrb[0].mxu0 %v764
      %v877 = vpop.f32.mrb[0].mxu0
      %v878 = vadd.f32 %v793, %v877
      %v879 = vpop.f32.mrb[0].mxu0
      %v880 = vpop.f32.mrb[0].mxu0
      %v881 = vadd.f32 %v793, %v880
      %v882 = vpop.f32.mrb[0].mxu0
      %883 = vmatprep.mubr.bf16.mxu0 0
      %884 = vmatmul.mubr.bf16.gmra.mrb[0].mxu0 %v765
      %v885 = vpop.f32.mrb[0].mxu0
      %v886 = vadd.f32 %v793, %v885
      %v887 = vpop.f32.mrb[0].mxu0
      %v888 = vpop.f32.mrb[0].mxu0
      %v889 = vadd.f32 %v793, %v888
      %v890 = vpop.f32.mrb[0].mxu0
      %891 = vmatprep.mubr.bf16.mxu0 0
      %892 = vmatmul.mubr.bf16.gmra.mrb[0].mxu0 %v766
      %v893 = vpop.f32.mrb[0].mxu0
      %v894 = vadd.f32 %v793, %v893
      %v895 = vpop.f32.mrb[0].mxu0
      %v896 = vpop.f32.mrb[0].mxu0
      %v897 = vadd.f32 %v793, %v896
      %v898 = vpop.f32.mrb[0].mxu0
      %899 = vmatprep.mubr.bf16.mxu0 0
      %900 = vmatmul.mubr.bf16.gmra.mrb[0].mxu0 %v767
      %v901 = vpop.f32.mrb[0].mxu0
      %v902 = vadd.f32 %v793, %v901
      %v903 = vpop.f32.mrb[0].mxu0
      %v904 = vpop.f32.mrb[0].mxu0
      %v905 = vadd.f32 %v793, %v904
      %v906 = vpop.f32.mrb[0].mxu0
      %907 = vmatprep.mubr.bf16.mxu0 0
      %908 = vmatmul.mubr.bf16.gmra.mrb[0].mxu0 %v768
      %v909 = vpop.f32.mrb[0].mxu0
      %v910 = vadd.f32 %v793, %v909
      %v911 = vpop.f32.mrb[0].mxu0
      %v912 = vpop.f32.mrb[0].mxu0
      %v913 = vadd.f32 %v793, %v912
      %v914 = vpop.f32.mrb[0].mxu0
      %915 = vmatprep.mubr.bf16.mxu0 0
      %916 = vmatmul.mubr.bf16.gmra.mrb[0].mxu0 %v769
      %v917 = vpop.f32.mrb[0].mxu0
      %v918 = vadd.f32 %v793, %v917
      %v919 = vpop.f32.mrb[0].mxu0
      %v920 = vpop.f32.mrb[0].mxu0
      %v921 = vadd.f32 %v793, %v920
      %v922 = vpop.f32.mrb[0].mxu0
      %923 = vmatprep.mubr.bf16.mxu0 0
      %924 = vmatmul.mubr.bf16.gmra.mrb[0].mxu0 %v770
      %v925 = vpop.f32.mrb[0].mxu0
      %v926 = vadd.f32 %v793, %v925
      %v927 = vpop.f32.mrb[0].mxu0
      %v928 = vpop.f32.mrb[0].mxu0
      %v929 = vadd.f32 %v793, %v928
      %v930 = vpop.f32.mrb[0].mxu0
      %931 = vmatprep.mubr.bf16.mxu0 0
      %932 = vmatmul.mubr.bf16.gmra.mrb[0].mxu0 %v771
      %v933 = vpop.f32.mrb[0].mxu0
      %v934 = vadd.f32 %v793, %v933
      %v935 = vpop.f32.mrb[0].mxu0
      %v936 = vpop.f32.mrb[0].mxu0
      %v937 = vadd.f32 %v793, %v936
      %v938 = vpop.f32.mrb[0].mxu0
      %939 = vdwg.mxu0
      %v940 = vlaneseq
      %v941 = vand.u32 %v940, 127
      %vm942 = vcmp.lt.s32.totalorder %v941, 4
      %v943 = vtanh.pop %v878
      %v944 = vtanh.pop %v881
      %v945 = vtanh.pop %v886
      %v946 = vtanh.pop %v889
      %v947 = vtanh.pop %v894
      %v948 = vtanh.pop %v897
      %v949 = vtanh.pop %v902
      %v950 = vtanh.pop %v905
      %v951 = vtanh.pop %v910
      %v952 = vtanh.pop %v913
      %v953 = vtanh.pop %v918
      %v954 = vtanh.pop %v921
      %v955 = vtanh.pop %v926
      %v956 = vtanh.pop %v929
      %v957 = vtanh.pop %v934
      %v958 = vtanh.pop %v937
      %v959 = vsel %vm942, %v943, %v878
      %v960 = vsel %vm942, %v944, %v881
      %v961 = vsel %vm942, %v945, %v886
      %v962 = vsel %vm942, %v946, %v889
      %v963 = vsel %vm942, %v947, %v894
      %v964 = vsel %vm942, %v948, %v897
      %v965 = vsel %vm942, %v949, %v902
      %v966 = vsel %vm942, %v950, %v905
      %v967 = vsel %vm942, %v951, %v910
      %v968 = vsel %vm942, %v952, %v913
      %v969 = vsel %vm942, %v953, %v918
      %v970 = vsel %vm942, %v954, %v921
      %v971 = vsel %vm942, %v955, %v926
      %v972 = vsel %vm942, %v956, %v929
      %v973 = vsel %vm942, %v957, %v934
      %v974 = vsel %vm942, %v958, %v937
      %v975 = vld [vmem:[%s378] sm:$0xff]
      %v976 = vld [vmem:[%s378 + $0x8] sm:$0xff]
      %v977 = vld [vmem:[%s378 + $0x10] sm:$0xff]
      %v978 = vld [vmem:[%s378 + $0x18] sm:$0xff]
      %v979 = vld [vmem:[%s378 + $0x20] sm:$0xff]
      %v980 = vld [vmem:[%s378 + $0x28] sm:$0xff]
      %v981 = vld [vmem:[%s378 + $0x30] sm:$0xff]
      %v982 = vld [vmem:[%s378 + $0x38] sm:$0xff]
      %v983 = vld [vmem:[%s378 + $0x40] sm:$0xff]
      %v984 = vld [vmem:[%s378 + $0x48] sm:$0xff]
      %v985 = vld [vmem:[%s378 + $0x50] sm:$0xff]
      %v986 = vld [vmem:[%s378 + $0x58] sm:$0xff]
      %v987 = vld [vmem:[%s378 + $0x60] sm:$0xff]
      %v988 = vld [vmem:[%s378 + $0x68] sm:$0xff]
      %v989 = vld [vmem:[%s378 + $0x70] sm:$0xff]
      %v990 = vld [vmem:[%s378 + $0x78] sm:$0xff]
      %v991 = vsub.f32 %v975, %v959
      %v992 = vsub.f32 %v976, %v960
      %v993 = vsub.f32 %v977, %v961
      %v994 = vsub.f32 %v978, %v962
      %v995 = vsub.f32 %v979, %v963
      %v996 = vsub.f32 %v980, %v964
      %v997 = vsub.f32 %v981, %v965
      %v998 = vsub.f32 %v982, %v966
      %v999 = vsub.f32 %v983, %v967
      %v1000 = vsub.f32 %v984, %v968
      %v1001 = vsub.f32 %v985, %v969
      %v1002 = vsub.f32 %v986, %v970
      %v1003 = vsub.f32 %v987, %v971
      %v1004 = vsub.f32 %v988, %v972
      %v1005 = vsub.f32 %v989, %v973
      %v1006 = vsub.f32 %v990, %v974
      %v1007 = vmul.f32 %v991, %v991
      %v1008 = vmul.f32 %v992, %v992
      %v1009 = vmul.f32 %v993, %v993
      %v1010 = vmul.f32 %v994, %v994
      %v1011 = vmul.f32 %v995, %v995
      %v1012 = vmul.f32 %v996, %v996
      %v1013 = vmul.f32 %v997, %v997
      %v1014 = vmul.f32 %v998, %v998
      %v1015 = vmul.f32 %v999, %v999
      %v1016 = vmul.f32 %v1000, %v1000
      %v1017 = vmul.f32 %v1001, %v1001
      %v1018 = vmul.f32 %v1002, %v1002
      %v1019 = vmul.f32 %v1003, %v1003
      %v1020 = vmul.f32 %v1004, %v1004
      %v1021 = vmul.f32 %v1005, %v1005
      %v1022 = vmul.f32 %v1006, %v1006
      %v1023 = vld [vmem:[%s2] sm:$0x1]
      %v1025 = vlaneseq
      %v1026 = vshrl.u32 %v1025, 7
      %v1027 = vsub.s32 0, %v1026
      %v1028 = vrot.slane %v1023, %v1027
      %v1030 = vmul.f32 %v1007, %v1028
      %v1031 = vmul.f32 %v1008, %v1028
      %v1032 = vmul.f32 %v1009, %v1028
      %v1033 = vmul.f32 %v1010, %v1028
      %v1034 = vmul.f32 %v1011, %v1028
      %v1035 = vmul.f32 %v1012, %v1028
      %v1036 = vmul.f32 %v1013, %v1028
      %v1037 = vmul.f32 %v1014, %v1028
      %v1038 = vmul.f32 %v1015, %v1028
      %v1039 = vmul.f32 %v1016, %v1028
      %v1040 = vmul.f32 %v1017, %v1028
      %v1041 = vmul.f32 %v1018, %v1028
      %v1042 = vmul.f32 %v1019, %v1028
      %v1043 = vmul.f32 %v1020, %v1028
      %v1044 = vmul.f32 %v1021, %v1028
      %v1045 = vmul.f32 %v1022, %v1028
      %1046 = vadd.xlane.f32.xlu0 %v1030
      %v1047 = vpop.xlane.xlu0 %1046
      %1048 = vadd.xlane.f32.xlu0 %v1031
      %v1049 = vpop.xlane.xlu0 %1048
      %1050 = vadd.xlane.f32.xlu0 %v1032
      %v1051 = vpop.xlane.xlu0 %1050
      %1052 = vadd.xlane.f32.xlu0 %v1033
      %v1053 = vpop.xlane.xlu0 %1052
      %1054 = vadd.xlane.f32.xlu0 %v1034
      %v1055 = vpop.xlane.xlu0 %1054
      %1056 = vadd.xlane.f32.xlu0 %v1035
      %v1057 = vpop.xlane.xlu0 %1056
      %1058 = vadd.xlane.f32.xlu0 %v1036
      %v1059 = vpop.xlane.xlu0 %1058
      %1060 = vadd.xlane.f32.xlu0 %v1037
      %v1061 = vpop.xlane.xlu0 %1060
      %1062 = vadd.xlane.f32.xlu0 %v1038
      %v1063 = vpop.xlane.xlu0 %1062
      %1064 = vadd.xlane.f32.xlu0 %v1039
      %v1065 = vpop.xlane.xlu0 %1064
      %1066 = vadd.xlane.f32.xlu0 %v1040
      %v1067 = vpop.xlane.xlu0 %1066
      %1068 = vadd.xlane.f32.xlu0 %v1041
      %v1069 = vpop.xlane.xlu0 %1068
      %1070 = vadd.xlane.f32.xlu0 %v1042
      %v1071 = vpop.xlane.xlu0 %1070
      %1072 = vadd.xlane.f32.xlu0 %v1043
      %v1073 = vpop.xlane.xlu0 %1072
      %1074 = vadd.xlane.f32.xlu0 %v1044
      %v1075 = vpop.xlane.xlu0 %1074
      %1076 = vadd.xlane.f32.xlu0 %v1045
      %v1077 = vpop.xlane.xlu0 %1076
      %s1078 = sld [smem:[#allocation2]]
      %v1079 = vstv %s1078
      %v1080 = vadd.f32 %v1047, %v1079
      %v1081 = vadd.f32 %v1049, %v1079
      %v1082 = vadd.f32 %v1051, %v1079
      %v1083 = vadd.f32 %v1053, %v1079
      %v1084 = vadd.f32 %v1055, %v1079
      %v1085 = vadd.f32 %v1057, %v1079
      %v1086 = vadd.f32 %v1059, %v1079
      %v1087 = vadd.f32 %v1061, %v1079
      %v1088 = vadd.f32 %v1063, %v1079
      %v1089 = vadd.f32 %v1065, %v1079
      %v1090 = vadd.f32 %v1067, %v1079
      %v1091 = vadd.f32 %v1069, %v1079
      %v1092 = vadd.f32 %v1071, %v1079
      %v1093 = vadd.f32 %v1073, %v1079
      %v1094 = vadd.f32 %v1075, %v1079
      %v1095 = vadd.f32 %v1077, %v1079
      %v1096 = vmul.f32 %v1080, -0.5
      %v1097 = vmul.f32 %v1081, -0.5
      %v1098 = vmul.f32 %v1082, -0.5
      %v1099 = vmul.f32 %v1083, -0.5
      %v1100 = vmul.f32 %v1084, -0.5
      %v1101 = vmul.f32 %v1085, -0.5
      %v1102 = vmul.f32 %v1086, -0.5
      %v1103 = vmul.f32 %v1087, -0.5
      %v1104 = vmul.f32 %v1088, -0.5
      %v1105 = vmul.f32 %v1089, -0.5
      %v1106 = vmul.f32 %v1090, -0.5
      %v1107 = vmul.f32 %v1091, -0.5
      %v1108 = vmul.f32 %v1092, -0.5
      %v1109 = vmul.f32 %v1093, -0.5
      %v1110 = vmul.f32 %v1094, -0.5
      %v1111 = vmul.f32 %v1095, -0.5
      %vm1112 = vcmp.eq.s32.totalorder %v941, 4
      %v1113 = vsel %vm1112, %v1096, %v959
      %v1114 = vsel %vm1112, %v1097, %v960
      %v1115 = vsel %vm1112, %v1098, %v961
      %v1116 = vsel %vm1112, %v1099, %v962
      %v1117 = vsel %vm1112, %v1100, %v963
      %v1118 = vsel %vm1112, %v1101, %v964
      %v1119 = vsel %vm1112, %v1102, %v965
      %v1120 = vsel %vm1112, %v1103, %v966
      %v1121 = vsel %vm1112, %v1104, %v967
      %v1122 = vsel %vm1112, %v1105, %v968
      %v1123 = vsel %vm1112, %v1106, %v969
      %v1124 = vsel %vm1112, %v1107, %v970
      %v1125 = vsel %vm1112, %v1108, %v971
      %v1126 = vsel %vm1112, %v1109, %v972
      %v1127 = vsel %vm1112, %v1110, %v973
      %v1128 = vsel %vm1112, %v1111, %v974
      %1129 = vst [vmem:[%s384] sm:$0xff] %v1113
      %1130 = vst [vmem:[%s384 + $0x8] sm:$0xff] %v1114
      %1131 = vst [vmem:[%s384 + $0x10] sm:$0xff] %v1115
      %1132 = vst [vmem:[%s384 + $0x18] sm:$0xff] %v1116
      %1133 = vst [vmem:[%s384 + $0x20] sm:$0xff] %v1117
      %1134 = vst [vmem:[%s384 + $0x28] sm:$0xff] %v1118
      %1135 = vst [vmem:[%s384 + $0x30] sm:$0xff] %v1119
      %1136 = vst [vmem:[%s384 + $0x38] sm:$0xff] %v1120
      %1137 = vst [vmem:[%s384 + $0x40] sm:$0xff] %v1121
      %1138 = vst [vmem:[%s384 + $0x48] sm:$0xff] %v1122
      %1139 = vst [vmem:[%s384 + $0x50] sm:$0xff] %v1123
      %1140 = vst [vmem:[%s384 + $0x58] sm:$0xff] %v1124
      %1141 = vst [vmem:[%s384 + $0x60] sm:$0xff] %v1125
      %1142 = vst [vmem:[%s384 + $0x68] sm:$0xff] %v1126
      %1143 = vst [vmem:[%s384 + $0x70] sm:$0xff] %v1127
      %1144 = vst [vmem:[%s384 + $0x78] sm:$0xff] %v1128
      %s1145 = smul.u32 16, %s22
      %p1146 = scmp.lt.s32.totalorder %s1145, 63
      %s1147 = scalar_select %p1146, %s1145, 63
      %s1148 = smul.addr %s1147, 8
      %s1149 = scalar_lea.vmem %s10, %s1148
      // Predicated region
      $region61: #{actor_critic_evaluate.1} parent=59 // pred_check
        %p1150 = pneg %p260
      $region62: #{actor_critic_evaluate.1} parent=59 // pred_check_branch
        %1152 = sbr.rel (%p1150) target = $region64
      $region63: #{actor_critic_evaluate.1} parent=59 // pred_region
        %s1153 = smul.u32 16, %s22
      $region64: #{actor_critic_evaluate.1} parent=59 // pred_fallthru
        _
    $region60: #{actor_critic_evaluate.1} parent=5 // pred_fallthru
      _
    %p1154 = scmp.le.s32.totalorder 2, %s17
    // Predicated region
    $region65: #{actor_critic_evaluate.1} parent=5 // pred_check
      %p1155 = pneg %p1154
    $region66: #{actor_critic_evaluate.1} parent=5 // pred_check_branch
      %1157 = sbr.rel (%p1155) target = $region68
    $region67: #{actor_critic_evaluate.1} parent=5 // pred_region
      %s1158 = ssub.s32 %s17, 2
      // Predicated region
      $region69: #{actor_critic_evaluate.1} parent=67 // pred_check
        %p1159 = pneg %p266
      $region70: #{actor_critic_evaluate.1} parent=67 // pred_check_branch
        %1161 = sbr.rel (%p1159) target = $region72
      $region71: #{actor_critic_evaluate.1} parent=67 // pred_region
        %s1162 = smul.u32 16, %s23
        %p1163 = scmp.lt.s32.totalorder %s1162, 63
        %s1164 = scalar_select %p1163, %s1162, 63
        %s1165 = smul.addr %s1164, 8
        %s1166 = scalar_lea.vmem %s10, %s1165
      $region72: #{actor_critic_evaluate.1} parent=67 // pred_fallthru
        _
    $region68: #{actor_critic_evaluate.1} parent=5 // pred_fallthru
      _
  $region6: #{actor_critic_evaluate.1} parent=0 // loop_footer
    %s21 = sadd.s32 1, %s17
  $region7: #{actor_critic_evaluate.1} parent=0 // loop_footer_branch
    %16 = sbr.rel target = $region3
  $region8: #{actor_critic_evaluate.1} parent=0 // loop_exit
    _

</llo_original>
